<compile_context>
chip_gen: v7x
topology: tpu7x:2x2x1
jax: 0.10.0
libtpu: 0.0.40
codegen_flags: <defaults>
</compile_context>

<pallas_src>
import functools
import math

import numpy as np
import jax
import jax.numpy as jnp
from jax.experimental import pallas as pl
from jax.experimental.pallas import tpu as pltpu


# ---------------------------------------------------------------------------
# Kernel 1: fused, tiled QKV projection  (x[TILE_M, H] @ W3[H, 3H] + b3)
# ---------------------------------------------------------------------------
def qkv_proj_kernel(x_ref, w_ref, b_ref, q_ref, k_ref, v_ref, *, hidden):
    x = x_ref[...]                      # (TILE_M, H)   compute dtype
    w = w_ref[...]                      # (H, 3H)       resident across grid steps
    y = jnp.dot(x, w, preferred_element_type=jnp.float32) + b_ref[...]
    q_ref[...] = y[:, :hidden].astype(q_ref.dtype)
    k_ref[...] = y[:, hidden:2 * hidden].astype(k_ref.dtype)
    v_ref[...] = y[:, 2 * hidden:].astype(v_ref.dtype)


# ---------------------------------------------------------------------------
# Kernel 2: attention for one (batch, query-tile) grid cell.
#   q_ref : (1, tq, H)   k_ref/v_ref : (1, S, H)  (resident across query tiles)
#   mask  : (1, 1, S) or (1, tq, S)   ctx : (1, tq, H)   probs: (1, heads, tq, S)
# ---------------------------------------------------------------------------
def attention_kernel(q_ref, k_ref, v_ref, mask_ref, ctx_ref, *probs_refs,
                     num_heads, head_dim):
    probs_ref = probs_refs[0] if probs_refs else None
    q = q_ref[0]          # (tq, H); 1/sqrt(d) already folded into wq/bq
    k = k_ref[0]          # (S, H)
    v = v_ref[0]          # (S, H)
    m = mask_ref[0]       # (1, S) or (tq, S) additive mask

    for h in range(num_heads):                 # static unroll; offsets are static
        lo = h * head_dim
        qh = q[:, lo:lo + head_dim]            # (tq, d)
        kh = k[:, lo:lo + head_dim]            # (S, d)
        vh = v[:, lo:lo + head_dim]            # (S, d)

        # Contract over d directly (no materialized k.T / XLU transpose).
        s = jax.lax.dot_general(qh, kh, (((1,), (1,)), ((), ())),
                                preferred_element_type=jnp.float32)  # (tq, S)
        s = s + m

        # Numerically stable softmax in f32; reciprocal on the EUP slot.
        row_max = jnp.max(s, axis=-1, keepdims=True)
        e = jnp.exp(s - row_max)
        denom = jnp.sum(e, axis=-1, keepdims=True)
        p = e * pl.reciprocal(denom, approx=True)

        if probs_ref is not None:
            probs_ref[0, h] = p.astype(probs_ref.dtype)

        # Store this head's columns directly into the resident ctx block
        # (static lane offset) — no per-head values stay live, no concatenate.
        ctx_ref[0, :, lo:lo + head_dim] = jnp.dot(
            p.astype(v.dtype), vh,
            preferred_element_type=jnp.float32).astype(ctx_ref.dtype)


def _clamp_vmem(nbytes):
    # >= 32 MiB (above the 16/32 MiB scoped defaults), <= 64 MiB (v7x physical).
    return int(min(max(nbytes, 32 * 1024 * 1024), 64 * 1024 * 1024))


# ---------------------------------------------------------------------------
# Wrapper
# ---------------------------------------------------------------------------
def self_attention(hidden_states, attention_mask, params, num_heads, *,
                   compute_dtype=jnp.bfloat16, tile_m=512, tile_q=256,
                   return_probs=True):
    """hidden_states: [B, S, H]; attention_mask: [B,1,1,S] or [B,1,S,S] additive."""
    B, S, H = hidden_states.shape
    assert H % num_heads == 0
    d = H // num_heads
    scale = 1.0 / math.sqrt(d)
    cd = np.dtype(compute_dtype).itemsize

    # Host-side (free): fuse the three projections and fold the score scale
    # into the query weight/bias.
    w3 = jnp.concatenate(
        [params["wq"] * scale, params["wk"], params["wv"]], axis=1
    ).astype(compute_dtype)                                           # (H, 3H)
    b3 = jnp.concatenate(
        [params["bq"] * scale, params["bk"], params["bv"]], axis=1
    ).astype(jnp.float32)                                             # (1, 3H)

    M = B * S
    x2d = hidden_states.reshape(M, H).astype(compute_dtype)

    tm = min(tile_m, M)
    grid_m = pl.cdiv(M, tm)

    qkv_vmem = 2 * cd * (tm * H + H * 3 * H + 3 * tm * H) + 2 * 4 * 3 * H + (2 << 20)
    qkv_cost = pl.CostEstimate(
        flops=2 * M * H * 3 * H,
        transcendentals=0,
        bytes_accessed=(M * H + H * 3 * H + 3 * M * H) * cd + 3 * H * 4)

    # --- fused QKV projection, tiled & pipelined over M -------------------
    q2d, k2d, v2d = pl.pallas_call(
        functools.partial(qkv_proj_kernel, hidden=H),
        grid=(grid_m,),
        in_specs=[
            pl.BlockSpec((tm, H), lambda i: (i, 0)),       # x tile
            pl.BlockSpec((H, 3 * H), lambda i: (0, 0)),    # fused weight (resident)
            pl.BlockSpec((1, 3 * H), lambda i: (0, 0)),    # fused bias (resident)
        ],
        out_specs=(
            pl.BlockSpec((tm, H), lambda i: (i, 0)),
            pl.BlockSpec((tm, H), lambda i: (i, 0)),
            pl.BlockSpec((tm, H), lambda i: (i, 0)),
        ),
        out_shape=(
            jax.ShapeDtypeStruct((M, H), compute_dtype),
            jax.ShapeDtypeStruct((M, H), compute_dtype),
            jax.ShapeDtypeStruct((M, H), compute_dtype),
        ),
        compiler_params=pltpu.CompilerParams(
            dimension_semantics=("parallel",),
            vmem_limit_bytes=_clamp_vmem(qkv_vmem)),
        cost_estimate=qkv_cost,
    )(x2d, w3, b3)

    # Free metadata reshapes only — no head transposes / HBM round-trips.
    qh = q2d.reshape(B, S, H)
    kh = k2d.reshape(B, S, H)
    vh = v2d.reshape(B, S, H)

    # Additive mask: key-broadcast [B,1,1,S] -> (B,1,S); per-query [B,1,S,S] -> (B,S,S).
    mq = attention_mask.shape[2]
    assert mq in (1, S), "mask must be [B,1,1,S] or [B,1,S,S]"
    mask = attention_mask.reshape(B, mq, S).astype(jnp.float32)

    # --- query-tile size: fit a conservative VMEM budget (v7x-safe) --------
    tq = min(tile_q, S)
    if S % tq:
        tq = S

    def attn_vmem(tq_):
        b = 2 * cd * (2 * tq_ * H + 2 * S * H)            # q + ctx + k + v buffers
        if return_probs:
            b += 2 * cd * num_heads * tq_ * S             # probs buffers
        b += 2 * 4 * mq * S                               # mask buffers (f32)
        b += 4 * 4 * tq_ * S                              # f32 in-kernel intermediates
        return b + (2 << 20)

    budget = 48 * 1024 * 1024
    while (attn_vmem(tq) > budget and tq > 8
           and S % (tq // 2) == 0 and (tq // 2) % 8 == 0):
        tq //= 2
    grid_q = S // tq

    if mq == 1:
        mask_spec = pl.BlockSpec((1, 1, S), lambda b, i: (b, 0, 0))
    else:
        mask_spec = pl.BlockSpec((1, tq, S), lambda b, i: (b, i, 0))

    attn_bytes = 4 * B * S * H * cd + B * mq * S * 4
    if return_probs:
        attn_bytes += B * num_heads * S * S * cd
    attn_cost = pl.CostEstimate(
        flops=4 * B * num_heads * S * S * d,
        transcendentals=B * num_heads * S * S,
        bytes_accessed=attn_bytes)

    in_specs = [
        pl.BlockSpec((1, tq, H), lambda b, i: (b, i, 0)),   # q tile
        pl.BlockSpec((1, S, H), lambda b, i: (b, 0, 0)),    # k slab (resident over i)
        pl.BlockSpec((1, S, H), lambda b, i: (b, 0, 0)),    # v slab (resident over i)
        mask_spec,
    ]
    out_specs = [pl.BlockSpec((1, tq, H), lambda b, i: (b, i, 0))]
    out_shape = [jax.ShapeDtypeStruct((B, S, H), compute_dtype)]
    if return_probs:
        out_specs.append(
            pl.BlockSpec((1, num_heads, tq, S), lambda b, i: (b, 0, i, 0)))
        out_shape.append(
            jax.ShapeDtypeStruct((B, num_heads, S, S), compute_dtype))

    kern = functools.partial(attention_kernel, num_heads=num_heads, head_dim=d)
    outs = pl.pallas_call(
        kern,
        grid=(B, grid_q),
        in_specs=in_specs,
        out_specs=tuple(out_specs),
        out_shape=tuple(out_shape),
        compiler_params=pltpu.CompilerParams(
            dimension_semantics=("parallel", "parallel"),
            vmem_limit_bytes=_clamp_vmem(attn_vmem(tq))),
        cost_estimate=attn_cost,
    )(qh, kh, vh, mask)

    if not isinstance(outs, (list, tuple)):
        outs = (outs,)
    if return_probs:
        context, probs = outs
        return context, probs
    (context,) = outs
    return context, None


# ---------------------------------------------------------------------------
# Pure-JAX reference for correctness check
# ---------------------------------------------------------------------------
def self_attention_ref(hidden_states, attention_mask, params, num_heads):
    B, S, H = hidden_states.shape
    d = H // num_heads
    x = hidden_states
    q = x @ params["wq"] + params["bq"]
    k = x @ params["wk"] + params["bk"]
    v = x @ params["wv"] + params["bv"]

    def to_heads(t):
        return t.reshape(B, S, num_heads, d).transpose(0, 2, 1, 3)

    qh, kh, vh = to_heads(q), to_heads(k), to_heads(v)
    scores = jnp.einsum("bhqd,bhkd->bhqk", qh, kh) / math.sqrt(d)
    scores = scores + attention_mask
    probs = jax.nn.softmax(scores, axis=-1)
    ctx = jnp.einsum("bhqk,bhkd->bhqd", probs, vh)
    ctx = ctx.transpose(0, 2, 1, 3).reshape(B, S, H)
    return ctx, probs


if __name__ == "__main__":
    # Small shapes consistent with the module.
    B, S, H, NUM_HEADS = 2, 8, 32, 4

    key = jax.random.PRNGKey(0)
    k_x, k_m, k_wq, k_wk, k_wv, k_bq, k_bk, k_bv = jax.random.split(key, 8)

    hidden_states = jax.random.normal(k_x, (B, S, H), dtype=jnp.float32)
    # BERT-style additive mask: 0 for keep, -10000 for masked positions.
    mask_bits = (jax.random.uniform(k_m, (B, 1, 1, S)) > 0.2).astype(jnp.float32)
    attention_mask = (1.0 - mask_bits) * -10000.0

    sc = 1.0 / math.sqrt(H)
    params = {
        "wq": jax.random.uniform(k_wq, (H, H), jnp.float32, -sc, sc),
        "wk": jax.random.uniform(k_wk, (H, H), jnp.float32, -sc, sc),
        "wv": jax.random.uniform(k_wv, (H, H), jnp.float32, -sc, sc),
        "bq": jax.random.uniform(k_bq, (1, H), jnp.float32, -sc, sc),
        "bk": jax.random.uniform(k_bk, (1, H), jnp.float32, -sc, sc),
        "bv": jax.random.uniform(k_bv, (1, H), jnp.float32, -sc, sc),
    }

    ctx_r, probs_r = self_attention_ref(hidden_states, attention_mask, params, NUM_HEADS)

    # f32 path: preserves module numerics (tolerance covers the EUP approx
    # reciprocal in the softmax normalization).
    ctx32, probs32 = self_attention(hidden_states, attention_mask, params,
                                    NUM_HEADS, compute_dtype=jnp.float32)
    jax.block_until_ready((ctx32, probs32))
    assert jnp.allclose(ctx32, ctx_r, atol=5e-3, rtol=5e-3)
    assert jnp.allclose(probs32, probs_r, atol=5e-3, rtol=5e-3)

    # Default bf16 MXU fast path (f32 accumulation + f32 softmax), looser tol.
    ctx_bf, probs_bf = self_attention(hidden_states, attention_mask, params, NUM_HEADS)
    jax.block_until_ready((ctx_bf, probs_bf))
    assert jnp.allclose(ctx_bf.astype(jnp.float32), ctx_r, atol=1e-1, rtol=1e-1)
    assert jnp.allclose(probs_bf.astype(jnp.float32), probs_r, atol=1e-1, rtol=1e-1)

    # Probs-free path (skips the O(S^2) HBM writeback entirely).
    ctx_np, probs_np = self_attention(hidden_states, attention_mask, params,
                                      NUM_HEADS, return_probs=False)
    jax.block_until_ready(ctx_np)
    assert probs_np is None
    assert jnp.allclose(ctx_np.astype(jnp.float32), ctx_r, atol=1e-1, rtol=1e-1)

    print("KERNEL_OK")
</pallas_src>

<mosaic_0001>
module attributes {stable_mosaic.version = 11 : i64} {
  func.func @qkv_proj_kernel(%arg0: i32, %arg1: memref<16x32xf32, #tpu.memory_space<vmem>>, %arg2: memref<32x96xf32, #tpu.memory_space<vmem>>, %arg3: memref<1x96xf32, #tpu.memory_space<vmem>>, %arg4: memref<16x32xf32, #tpu.memory_space<vmem>>, %arg5: memref<16x32xf32, #tpu.memory_space<vmem>>, %arg6: memref<16x32xf32, #tpu.memory_space<vmem>>) attributes {dimension_semantics = [#tpu.dimension_semantics<parallel>], iteration_bounds = array<i64: 1>, scalar_prefetch = 0 : i64, scratch_operands = 0 : i64, tpu.core_type = #tpu.core_type<tc>, window_params = [{transform_indices = @transform_0, window_bounds = array<i64: 16, 32>}, {pipeline_mode = #tpu.pipeline_mode<synchronous>, transform_indices = @transform_1, window_bounds = array<i64: 32, 96>}, {pipeline_mode = #tpu.pipeline_mode<synchronous>, transform_indices = @transform_2, window_bounds = array<i64: 1, 96>}, {transform_indices = @transform_3, window_bounds = array<i64: 16, 32>}, {transform_indices = @transform_4, window_bounds = array<i64: 16, 32>}, {transform_indices = @transform_5, window_bounds = array<i64: 16, 32>}]} {
    %c0 = arith.constant 0 : index
    %c0_0 = arith.constant 0 : index
    %0 = vector.load %arg1[%c0, %c0_0] : memref<16x32xf32, #tpu.memory_space<vmem>>, vector<16x32xf32>
    %c0_1 = arith.constant 0 : index
    %c0_2 = arith.constant 0 : index
    %1 = vector.load %arg2[%c0_1, %c0_2] : memref<32x96xf32, #tpu.memory_space<vmem>>, vector<32x96xf32>
    %cst = arith.constant dense<0.000000e+00> : vector<16x96xf32>
    %2 = tpu.matmul %0, %1, %cst {dimension_numbers = #tpu.dot_dimension_numbers<[1], [0], [0], [1], [0, 0, 1, 1], [], []>} : vector<16x32xf32>, vector<32x96xf32>, vector<16x96xf32> -> vector<16x96xf32>
    %c0_3 = arith.constant 0 : index
    %c0_4 = arith.constant 0 : index
    %3 = vector.load %arg3[%c0_3, %c0_4] : memref<1x96xf32, #tpu.memory_space<vmem>>, vector<1x96xf32>
    %4 = vector.broadcast %3 : vector<1x96xf32> to vector<16x96xf32>
    %5 = arith.addf %2, %4 : vector<16x96xf32>
    %6 = vector.extract_strided_slice %5 {offsets = [0, 0], sizes = [16, 32], strides = [1, 1]} : vector<16x96xf32> to vector<16x32xf32>
    %c0_5 = arith.constant 0 : index
    %c0_6 = arith.constant 0 : index
    %7 = vector.load %arg4[%c0_5, %c0_6] : memref<16x32xf32, #tpu.memory_space<vmem>>, vector<16x32xf32>
    tpu.vector_store %arg4[%c0_5, %c0_6], %6 {strides = array<i32>} : memref<16x32xf32, #tpu.memory_space<vmem>>, vector<16x32xf32>,
    %8 = vector.extract_strided_slice %5 {offsets = [0, 32], sizes = [16, 32], strides = [1, 1]} : vector<16x96xf32> to vector<16x32xf32>
    %c0_7 = arith.constant 0 : index
    %c0_8 = arith.constant 0 : index
    %9 = vector.load %arg5[%c0_7, %c0_8] : memref<16x32xf32, #tpu.memory_space<vmem>>, vector<16x32xf32>
    tpu.vector_store %arg5[%c0_7, %c0_8], %8 {strides = array<i32>} : memref<16x32xf32, #tpu.memory_space<vmem>>, vector<16x32xf32>,
    %10 = vector.extract_strided_slice %5 {offsets = [0, 64], sizes = [16, 32], strides = [1, 1]} : vector<16x96xf32> to vector<16x32xf32>
    %c0_9 = arith.constant 0 : index
    %c0_10 = arith.constant 0 : index
    %11 = vector.load %arg6[%c0_9, %c0_10] : memref<16x32xf32, #tpu.memory_space<vmem>>, vector<16x32xf32>
    tpu.vector_store %arg6[%c0_9, %c0_10], %10 {strides = array<i32>} : memref<16x32xf32, #tpu.memory_space<vmem>>, vector<16x32xf32>,
    return
  }
  func.func @transform_0(%arg0: i32) -> (i32, i32) {
    %c0_i32 = arith.constant 0 : i32
    %c0_i32_0 = arith.constant 0 : i32
    return %arg0, %c0_i32 : i32, i32
  }
  func.func @transform_1(%arg0: i32) -> (i32, i32) {
    %c0_i32 = arith.constant 0 : i32
    %c0_i32_0 = arith.constant 0 : i32
    %c0_i32_1 = arith.constant 0 : i32
    return %c0_i32, %c0_i32_0 : i32, i32
  }
  func.func @transform_2(%arg0: i32) -> (i32, i32) {
    %c0_i32 = arith.constant 0 : i32
    %c0_i32_0 = arith.constant 0 : i32
    %c0_i32_1 = arith.constant 0 : i32
    return %c0_i32, %c0_i32_0 : i32, i32
  }
  func.func @transform_3(%arg0: i32) -> (i32, i32) {
    %c0_i32 = arith.constant 0 : i32
    %c0_i32_0 = arith.constant 0 : i32
    return %arg0, %c0_i32 : i32, i32
  }
  func.func @transform_4(%arg0: i32) -> (i32, i32) {
    %c0_i32 = arith.constant 0 : i32
    %c0_i32_0 = arith.constant 0 : i32
    return %arg0, %c0_i32 : i32, i32
  }
  func.func @transform_5(%arg0: i32) -> (i32, i32) {
    %c0_i32 = arith.constant 0 : i32
    %c0_i32_0 = arith.constant 0 : i32
    return %arg0, %c0_i32 : i32, i32
  }
}

</mosaic_0001>

<llo_original>
// kernel: tpu_custom_call.1
$region0: #{tpu_custom_call.1}
  #allocation0 [shape = 'u32[]', space=smem, size = 0x4, offset = 0x4, fixed_abs, tag = 'smem constant byte address 0x4 - core index']
  #allocation1 [shape = 'u32[144,128]{1,0:T(1,128)}', space=vmem, size = 0x12000, scoped, tag = 'internal scratch']
  %s0 = inlined_call_operand.hbm [shape: f32[16,32], index: 0, kind: input, shape index: {}]
  %s1 = inlined_call_operand.hbm [shape: f32[32,96], index: 1, kind: input, shape index: {}]
  %s2 = inlined_call_operand.vmem [shape: f32[1,96], index: 2, kind: input, shape index: {}]
  %s3 = inlined_call_operand.hbm [shape: f32[16,32], index: 3, kind: output, shape index: {0}]
  %s4 = inlined_call_operand.hbm [shape: f32[16,32], index: 4, kind: output, shape index: {1}]
  %s5 = inlined_call_operand.hbm [shape: f32[16,32], index: 5, kind: output, shape index: {2}]
  %6 = xla_tuple %s3, %s4, %s5
  %s7 = sld [smem:[#allocation0]]
  $region46: #{tpu_custom_call.1} parent=0
    _
  %s9 = ssub.s32 1, %s7
  %s10 = scalar_select 0, %s9, %s7
  $region1: #{tpu_custom_call.1} parent=0
    #allocation2 [shape = 'u8[8192]{0}', space=vmem, size = 0x2000, scoped, tag = 'input window, operand 0, single buffered']
    #allocation3 [shape = 's32[1]{0}', space=sflag, size = 0x4, scoped, tag = 'scoped memory for tpu_custom_call.1']
    #allocation4 [shape = 's32[1]{0}', space=sflag, size = 0x4, scoped, tag = 'scoped memory for tpu_custom_call.1']
    #allocation5 [shape = 'u8[16384]{0}', space=vmem, size = 0x4000, scoped, tag = 'input window, operand 1, single buffered']
    #allocation6 [shape = 's32[1]{0}', space=sflag, size = 0x4, scoped, tag = 'scoped memory for tpu_custom_call.1']
    #allocation7 [shape = 'u8[8192]{0}', space=vmem, size = 0x2000, scoped, tag = 'output window, operand 0, single buffered']
    #allocation8 [shape = 'u8[8192]{0}', space=vmem, size = 0x2000, scoped, tag = 'output window, operand 1, single buffered']
    #allocation9 [shape = 's32[1]{0}', space=sflag, size = 0x4, scoped, tag = 'scoped memory for tpu_custom_call.1']
    #allocation10 [shape = 'u8[8192]{0}', space=vmem, size = 0x2000, scoped, tag = 'output window, operand 2, single buffered']
    %11 = vsyncpa [#allocation3], 0
    %12 = vsyncpa [#allocation6], 0
    %13 = vsyncpa [#allocation4], 0
    %14 = vsyncpa [#allocation9], 0
    // Predicated region
    $region2: #{tpu_custom_call.1} parent=1 // pred_check
      _
    $region3: #{tpu_custom_call.1} parent=1 // pred_check_branch
      %16 = sbr.rel (0) target = $region5
    $region4: #{tpu_custom_call.1} parent=1 // pred_region
      %s18 = ssub.s32 256, 256
      %19 = vsyncadd [#allocation3], %s18
      %s20 = sshll.u32 [#allocation2], 4
      %s21 = int_to_ptr.vmem [resolvable:$true] %s20
      %26 = dma.hbm_to_vmem [thread:$0]  %s0, 256, %s21, [#allocation3], 128, 128, 8
    $region5: #{tpu_custom_call.1} parent=1 // pred_fallthru
      _
    // Predicated region
    $region6: #{tpu_custom_call.1} parent=1 // pred_check
      _
    $region7: #{tpu_custom_call.1} parent=1 // pred_check_branch
      %28 = sbr.rel (0) target = $region9
    $region8: #{tpu_custom_call.1} parent=1 // pred_region
      %s30 = ssub.s32 512, 512
      %31 = vsyncadd [#allocation6], %s30
      %s32 = sshll.u32 [#allocation5], 4
      %s33 = int_to_ptr.vmem [resolvable:$true] %s32
      %38 = dma.hbm_to_vmem [thread:$0]  %s1, 512, %s33, [#allocation6], 128, 128, 8
    $region9: #{tpu_custom_call.1} parent=1 // pred_fallthru
      _
    // Predicated region
    $region10: #{tpu_custom_call.1} parent=1 // pred_check
      _
    $region11: #{tpu_custom_call.1} parent=1 // pred_check_branch
      %40 = sbr.rel (0) target = $region13
    $region12: #{tpu_custom_call.1} parent=1 // pred_region
      _
    $region13: #{tpu_custom_call.1} parent=1 // pred_fallthru
      _
    // Predicated region
    $region14: #{tpu_custom_call.1} parent=1 // pred_check
      _
    $region15: #{tpu_custom_call.1} parent=1 // pred_check_branch
      %42 = sbr.rel (0) target = $region17
    $region16: #{tpu_custom_call.1} parent=1 // pred_region
      %43 = dma.done [#allocation3], 256
    $region17: #{tpu_custom_call.1} parent=1 // pred_fallthru
      _
    // Predicated region
    $region18: #{tpu_custom_call.1} parent=1 // pred_check
      _
    $region19: #{tpu_custom_call.1} parent=1 // pred_check_branch
      %45 = sbr.rel (0) target = $region21
    $region20: #{tpu_custom_call.1} parent=1 // pred_region
      %46 = dma.done [#allocation6], 512
    $region21: #{tpu_custom_call.1} parent=1 // pred_fallthru
      _
    %v47 = vld [vmem:[#allocation2] sm:$0xff]
    %v48 = vld [vmem:[#allocation2 + $0x8] sm:$0xff]
    %v49 = vld [vmem:[#allocation5] sm:$0xff]
    %v50 = vld [vmem:[#allocation5 + $0x8] sm:$0xff]
    %v51 = vld [vmem:[#allocation5 + $0x10] sm:$0xff]
    %v52 = vld [vmem:[#allocation5 + $0x18] sm:$0xff]
    %v53 = vld [vmem:[%s2] sm:$0x1]
    %v55 = vlaneseq
    %v56 = vshrl.u32 %v55, 7
    %v57 = vsub.s32 0, %v56
    %v58 = vrot.slane %v53, %v57
    %vm60 = vcmask 261120
    %v62 = vsel %vm60, %v47, 0
    %v65 = vsel %vm60, %v48, 0
    %67 = vmatprep.subr.mxu0 0.0
    %68 = vmatpush1.msra.mxu0 %v49
    %69 = vmatprep.subr.mxu0 0.0
    %70 = vmatpush1.msra.mxu0 %v50
    %71 = vmatprep.subr.mxu0 0.0
    %72 = vmatpush1.msra.mxu0 %v51
    %73 = vmatprep.subr.mxu0 0.0
    %74 = vmatpush1.msra.mxu0 %v52
    %75 = vmatprep.subr.mxu0 0.0
    %76 = vmatpush1.msra.mxu0 0.0
    %77 = vmatprep.subr.mxu0 0.0
    %78 = vmatpush1.msra.mxu0 0.0
    %79 = vmatprep.subr.mxu0 0.0
    %80 = vmatpush1.msra.mxu0 0.0
    %81 = vmatprep.subr.mxu0 0.0
    %82 = vmatpush1.msra.mxu0 0.0
    %83 = vmatprep.subr.mxu0 0.0
    %84 = vmatpush1.msra.mxu0 0.0
    %85 = vmatprep.subr.mxu0 0.0
    %86 = vmatpush1.msra.mxu0 0.0
    %87 = vmatprep.subr.mxu0 0.0
    %88 = vmatpush1.msra.mxu0 0.0
    %89 = vmatprep.subr.mxu0 0.0
    %90 = vmatpush1.msra.mxu0 0.0
    %91 = vmatprep.subr.mxu0 0.0
    %92 = vmatpush1.msra.mxu0 0.0
    %93 = vmatprep.subr.mxu0 0.0
    %94 = vmatpush1.msra.mxu0 0.0
    %95 = vmatprep.subr.mxu0 0.0
    %96 = vmatpush1.msra.mxu0 0.0
    %97 = vmatprep.subr.mxu0 0.0
    %98 = vmatpush1.msra.mxu0 0.0
    %99 = vmatprep.subr.mxu0 0.0
    %100 = vmatpush1.msra.mxu0 0.0
    %101 = vmatprep.subr.mxu0 0.0
    %102 = vmatpush1.msra.mxu0 0.0
    %103 = vmatprep.subr.mxu0 0.0
    %104 = vmatpush1.msra.mxu0 0.0
    %105 = vmatprep.subr.mxu0 0.0
    %106 = vmatpush1.msra.mxu0 0.0
    %107 = vmatprep.subr.mxu0 0.0
    %108 = vmatpush1.msra.mxu0 0.0
    %109 = vmatprep.subr.mxu0 0.0
    %110 = vmatpush1.msra.mxu0 0.0
    %111 = vmatprep.subr.mxu0 0.0
    %112 = vmatpush1.msra.mxu0 0.0
    %113 = vmatprep.subr.mxu0 0.0
    %114 = vmatpush1.msra.mxu0 0.0
    %115 = vmatprep.subr.mxu0 0.0
    %116 = vmatpush1.msra.mxu0 0.0
    %117 = vmatprep.subr.mxu0 0.0
    %118 = vmatpush1.msra.mxu0 0.0
    %119 = vmatprep.subr.mxu0 0.0
    %120 = vmatpush1.msra.mxu0 0.0
    %121 = vmatprep.subr.mxu0 0.0
    %122 = vmatpush1.msra.mxu0 0.0
    %123 = vmatprep.subr.mxu0 0.0
    %124 = vmatpush1.msra.mxu0 0.0
    %125 = vmatprep.subr.mxu0 0.0
    %126 = vmatpush1.msra.mxu0 0.0
    %127 = vmatprep.subr.mxu0 0.0
    %128 = vmatpush1.msra.mxu0 0.0
    %129 = vmatprep.subr.mxu0 0.0
    %130 = vmatpush1.msra.mxu0 0.0
    %131 = vmatprep.mubr.f32.mxu0 0.0
    %132 = vmatmul.mubr.f32.gmra.mrb[0].mxu0 %v62
    %v133 = vpop.f32.mrb[0].mxu0
    %v134 = vadd.f32 %v58, %v133
    %v135 = vpop.f32.mrb[0].mxu0
    %136 = vmatprep.mubr.f32.mxu0 0.0
    %137 = vmatmul.mubr.f32.gmra.mrb[0].mxu0 %v65
    %v138 = vpop.f32.mrb[0].mxu0
    %v139 = vadd.f32 %v58, %v138
    %v140 = vpop.f32.mrb[0].mxu0
    %141 = vdwg.mxu0
    %142 = vst.msk [vmem:[#allocation7] sm:$0xff] %vm60, %v134
    %143 = vst.msk [vmem:[#allocation7 + $0x8] sm:$0xff] %vm60, %v139
    %146 = vrot.lane.b32.xlu0 %v134, 96
    %v147 = vpop.permute.xlu0 %146
    %148 = vrot.lane.b32.xlu0 %v139, 96
    %v149 = vpop.permute.xlu0 %148
    %152 = vst.msk [vmem:[#allocation8] sm:$0xff] %vm60, %v147
    %153 = vst.msk [vmem:[#allocation8 + $0x8] sm:$0xff] %vm60, %v149
    %154 = vrot.lane.b32.xlu0 %v134, 64
    %v155 = vpop.permute.xlu0 %154
    %156 = vrot.lane.b32.xlu0 %v139, 64
    %v157 = vpop.permute.xlu0 %156
    %160 = vst.msk [vmem:[#allocation10] sm:$0xff] %vm60, %v155
    %161 = vst.msk [vmem:[#allocation10 + $0x8] sm:$0xff] %vm60, %v157
    // Predicated region
    $region22: #{tpu_custom_call.1} parent=1 // pred_check
      _
    $region23: #{tpu_custom_call.1} parent=1 // pred_check_branch
      %163 = sbr.rel (0) target = $region25
    $region24: #{tpu_custom_call.1} parent=1 // pred_region
      %s165 = ssub.s32 256, 256
      %166 = vsyncadd [#allocation4], %s165
      %s167 = sshll.u32 [#allocation7], 4
      %s168 = int_to_ptr.vmem [resolvable:$true] %s167
      %173 = dma.vmem_to_hbm [thread:$0]  %s168, 256, %s3, [#allocation4], 128, 128, 8
    $region25: #{tpu_custom_call.1} parent=1 // pred_fallthru
      _
    // Predicated region
    $region26: #{tpu_custom_call.1} parent=1 // pred_check
      _
    $region27: #{tpu_custom_call.1} parent=1 // pred_check_branch
      %175 = sbr.rel (0) target = $region29
    $region28: #{tpu_custom_call.1} parent=1 // pred_region
      %s177 = ssub.s32 256, 256
      %178 = vsyncadd [#allocation9], %s177
      %s179 = sshll.u32 [#allocation8], 4
      %s180 = int_to_ptr.vmem [resolvable:$true] %s179
      %185 = dma.vmem_to_hbm [thread:$0]  %s180, 256, %s4, [#allocation9], 128, 128, 8
    $region29: #{tpu_custom_call.1} parent=1 // pred_fallthru
      _
    // Predicated region
    $region30: #{tpu_custom_call.1} parent=1 // pred_check
      _
    $region31: #{tpu_custom_call.1} parent=1 // pred_check_branch
      %187 = sbr.rel (0) target = $region33
    $region32: #{tpu_custom_call.1} parent=1 // pred_region
      %s189 = ssub.s32 256, 256
      %190 = vsyncadd [#allocation9], %s189
      %s191 = sshll.u32 [#allocation10], 4
      %s192 = int_to_ptr.vmem [resolvable:$true] %s191
      %197 = dma.vmem_to_hbm [thread:$0]  %s192, 256, %s5, [#allocation9], 128, 128, 8
    $region33: #{tpu_custom_call.1} parent=1 // pred_fallthru
      _
    // Predicated region
    $region34: #{tpu_custom_call.1} parent=1 // pred_check
      _
    $region35: #{tpu_custom_call.1} parent=1 // pred_check_branch
      %199 = sbr.rel (0) target = $region37
    $region36: #{tpu_custom_call.1} parent=1 // pred_region
      %200 = dma.done [#allocation4], 256
    $region37: #{tpu_custom_call.1} parent=1 // pred_fallthru
      _
    // Predicated region
    $region38: #{tpu_custom_call.1} parent=1 // pred_check
      _
    $region39: #{tpu_custom_call.1} parent=1 // pred_check_branch
      %202 = sbr.rel (0) target = $region41
    $region40: #{tpu_custom_call.1} parent=1 // pred_region
      %203 = dma.done [#allocation9], 256
    $region41: #{tpu_custom_call.1} parent=1 // pred_fallthru
      _
    // Predicated region
    $region42: #{tpu_custom_call.1} parent=1 // pred_check
      _
    $region43: #{tpu_custom_call.1} parent=1 // pred_check_branch
      %205 = sbr.rel (0) target = $region45
    $region44: #{tpu_custom_call.1} parent=1 // pred_region
      %206 = dma.done [#allocation9], 256
    $region45: #{tpu_custom_call.1} parent=1 // pred_fallthru
      _
    %207 = vsyncpa [#allocation3], 1
    %208 = vsyncpa [#allocation6], 1
    %209 = vsyncpa [#allocation4], 1
    %210 = vsyncpa [#allocation9], 1

</llo_original>
